<compile_context>
chip_gen: v7x
topology: tpu7x:2x2x1
jax: 0.10.0
libtpu: 0.0.40
codegen_flags: <defaults>
</compile_context>

<pallas_src>
import functools

import jax
import jax.numpy as jnp
from jax.experimental import pallas as pl
from jax.experimental.pallas import tpu as pltpu


# --------------------------------------------------------------------------
# Helpers
# --------------------------------------------------------------------------
def _round_up(x, m):
    return ((x + m - 1) // m) * m


def _sigmoid_recip(x):
    # sigmoid(x) = 1 / (1 + exp(-x)); exp on the EUP, divide on the EUP via
    # approx vrcp (keeps the VALU slot free).  x is f32 at every call site.
    return pl.reciprocal(1.0 + jnp.exp(-x), approx=True)


def device_flags():
    kind = ""
    try:
        kind = jax.devices()[0].device_kind.lower()
    except Exception:
        pass
    is_v5e = any(t in kind for t in ("v5 lite", "v5e", "v5lite"))
    preferred_tm = 1024 if is_v5e else 2048
    # K=3d=384 fills the 256-deep MXU on v6e/v7x; keep the 3-way K=128 split
    # on v5e whose MXU is 128 deep (already a perfect fit).
    fuse_k1 = not is_v5e
    return preferred_tm, fuse_k1


def select_tile_m(batch, preferred):
    if batch <= preferred:
        # Single grid step; block covers the whole padded batch, so any
        # multiple-of-8 row count is a legal block.
        return max(_round_up(batch, 8), 8)
    # Multiple grid steps: tiles a multiple of 256 (bf16 tiling-safe) and
    # >= ~4 steps so the "parallel" batch axis can shard across 2 TCs on v7x.
    return min(preferred, _round_up(-(-batch // 4), 256))


# --------------------------------------------------------------------------
# Pallas kernel: fused prednet MLP over one batch tile
#   out = sigmoid( L3( sigmoid( L2( sigmoid( L1([e,p,n]) ) ) ) ) )
# --------------------------------------------------------------------------
def prednet_kernel(e_ref, p_ref, n_ref,
                   w1_ref, b1_ref, w2_ref, b2_ref, w3_ref, b3_ref,
                   out_ref, *scratch, d, fuse_k1):
    e = e_ref[...]                                            # [TM, d] bf16
    p = p_ref[...]                                            # [TM, d] bf16
    n = n_ref[...]                                            # [TM, d] bf16

    if fuse_k1:
        # v6e/v7x: one K=3d dot fills the 256-deep MXU (half the weight
        # pushes vs three K=d slabs).  Same math as concat([e,p,n]) @ W1.
        (x_ref,) = scratch                                    # [TM, 3d] bf16
        x_ref[:, 0:d] = e
        x_ref[:, d:2 * d] = p
        x_ref[:, 2 * d:3 * d] = n
        h1 = jnp.dot(x_ref[...], w1_ref[...],
                     preferred_element_type=jnp.float32)
    else:
        # v5e: 128-deep MXU -> K=d=128 slabs are already a perfect fit.
        h1 = (jnp.dot(e, w1_ref[0:d, :], preferred_element_type=jnp.float32)
              + jnp.dot(p, w1_ref[d:2 * d, :],
                        preferred_element_type=jnp.float32)
              + jnp.dot(n, w1_ref[2 * d:3 * d, :],
                        preferred_element_type=jnp.float32))

    h1 = _sigmoid_recip(h1 + b1_ref[...])                     # [TM, 2d] f32
    # TODO(synk): Dropout(p=0.5) omitted — identity in eval/inference mode.

    h2 = jnp.dot(h1.astype(jnp.bfloat16), w2_ref[...],
                 preferred_element_type=jnp.float32) + b2_ref[...]  # [TM, d]
    h2 = _sigmoid_recip(h2)                                   # f32

    # Layer 3 (out_features = 1): VPU multiply + XLU lane reduction instead of
    # an N=1 MXU matmul.
    logits = jnp.sum(h2 * w3_ref[...], axis=-1, keepdims=True) + b3_ref[...]
    out_ref[...] = _sigmoid_recip(logits)                     # [TM, 1] f32


def prednet_pallas(exer_emb, u_pos, u_neg,
                   w1, b1, w2, b2, w3row, b3, *, tm, fuse_k1):
    bp, d = exer_emb.shape
    assert bp % tm == 0, "batch must be padded to a multiple of tm"

    row_spec = pl.BlockSpec((tm, d), lambda i: (i, 0))

    def const_spec(arr):
        # Whole array, same block every grid step -> stays VMEM-resident.
        return pl.BlockSpec(arr.shape, lambda i: (0, 0))

    scratch_shapes = ([pltpu.VMEM((tm, 3 * d), jnp.bfloat16)]
                      if fuse_k1 else [])

    kernel = functools.partial(prednet_kernel, d=d, fuse_k1=fuse_k1)

    grid_spec = pltpu.PrefetchScalarGridSpec(
        num_scalar_prefetch=0,
        grid=(bp // tm,),
        in_specs=[row_spec, row_spec, row_spec,
                  const_spec(w1), const_spec(b1),
                  const_spec(w2), const_spec(b2),
                  const_spec(w3row), const_spec(b3)],
        out_specs=pl.BlockSpec((tm, 1), lambda i: (i, 0)),
        scratch_shapes=scratch_shapes,
    )

    return pl.pallas_call(
        kernel,
        out_shape=jax.ShapeDtypeStruct((bp, 1), jnp.float32),
        grid_spec=grid_spec,
        compiler_params=pltpu.CompilerParams(
            dimension_semantics=("parallel",)),  # v7x: shard batch over 2 TCs
    )(exer_emb, u_pos, u_neg, w1, b1, w2, b2, w3row, b3)


# --------------------------------------------------------------------------
# Parameter construction (deterministic; mirrors PyTorch __init__/initialize,
# stored in kernel-ready layout: W stored [in, out]; bf16 embedding tables and
# MXU weights, f32 biases and f32 layer-3 row).
# --------------------------------------------------------------------------
def make_params(key, num_students, num_exercises, d_model):
    ks = jax.random.split(key, 6)

    # bert_model_name=None branch: nn.Embedding(948, d), normal(0, 0.1)
    exer_table = (0.1 * jax.random.normal(
        ks[0], (num_exercises, d_model), jnp.float32)).astype(jnp.bfloat16)
    # student embeddings: normal(0, 0.15)
    stu_pos = (0.15 * jax.random.normal(
        ks[1], (num_students, d_model), jnp.float32)).astype(jnp.bfloat16)
    stu_neg = (0.15 * jax.random.normal(
        ks[2], (num_students, d_model), jnp.float32)).astype(jnp.bfloat16)

    def xavier_uniform(k, fan_in, fan_out):
        limit = jnp.sqrt(6.0 / (fan_in + fan_out))
        # Stored as [in, out] (transposed vs. torch weight [out, in]).
        return jax.random.uniform(k, (fan_in, fan_out), jnp.float32,
                                  -limit, limit)

    d = d_model
    w1 = xavier_uniform(ks[3], 3 * d, 2 * d)                 # [3d, 2d] f32
    w2 = xavier_uniform(ks[4], 2 * d, d)                     # [2d, d]  f32
    w3 = xavier_uniform(ks[5], d, 1)                         # [d, 1]   f32

    return dict(
        exer_table=exer_table, stu_pos=stu_pos, stu_neg=stu_neg,
        w1=w1.astype(jnp.bfloat16),                          # [3d, 2d] bf16
        b1=jnp.zeros((1, 2 * d), jnp.float32),
        w2=w2.astype(jnp.bfloat16),                          # [2d, d]  bf16
        b2=jnp.zeros((1, d), jnp.float32),
        w3=w3.reshape(1, d),                                 # f32 row for VPU
        b3=jnp.zeros((1, 1), jnp.float32),
    )


# --------------------------------------------------------------------------
# Forward pass (matches MyCDM_MLP_backup.forward, id-embedding branch)
# --------------------------------------------------------------------------
def forward(params, stu_ids, exer_ids, *, tm, fuse_k1):
    b = stu_ids.shape[0]
    b_pad = _round_up(b, tm)
    pad = b_pad - b
    stu_p = jnp.pad(stu_ids, (0, pad))        # pad rows gather id 0 (valid),
    exe_p = jnp.pad(exer_ids, (0, pad))       # results sliced off below.

    # bf16 gathers -> bf16 embedding stream into the kernel.
    u_pos = jnp.take(params["stu_pos"], stu_p, axis=0)        # [B_pad, d] bf16
    u_neg = jnp.take(params["stu_neg"], stu_p, axis=0)        # [B_pad, d] bf16
    exer_emb = jnp.take(params["exer_table"], exe_p, axis=0)  # [B_pad, d] bf16

    out = prednet_pallas(exer_emb, u_pos, u_neg,
                         params["w1"], params["b1"],
                         params["w2"], params["b2"],
                         params["w3"], params["b3"],
                         tm=tm, fuse_k1=fuse_k1)              # [B_pad, 1]

    output = out[:b, 0]                                       # squeeze(-1)
    # Caller-facing embedding copies kept f32 (tables are bf16-quantized).
    return (output,
            exer_emb[:b].astype(jnp.float32),
            u_pos[:b].astype(jnp.float32),
            u_neg[:b].astype(jnp.float32))


# --------------------------------------------------------------------------
# Pure-JAX reference (f32 math from the same bf16 params) for sanity check.
# --------------------------------------------------------------------------
def reference_forward(params, stu_ids, exer_ids):
    u_pos = jnp.take(params["stu_pos"], stu_ids, axis=0).astype(jnp.float32)
    u_neg = jnp.take(params["stu_neg"], stu_ids, axis=0).astype(jnp.float32)
    exer_emb = jnp.take(params["exer_table"], exer_ids,
                        axis=0).astype(jnp.float32)
    x = jnp.concatenate([exer_emb, u_pos, u_neg], axis=1)
    h1 = jax.nn.sigmoid(x @ params["w1"].astype(jnp.float32) + params["b1"])
    h2 = jax.nn.sigmoid(h1 @ params["w2"].astype(jnp.float32) + params["b2"])
    logits = h2 @ params["w3"].T + params["b3"]
    return jax.nn.sigmoid(logits)[:, 0]


if __name__ == "__main__":
    # Small shapes consistent with the module (original d_model=768 -> 128).
    num_students = 16
    num_exercises = 948
    d_model = 128
    batch = 8

    preferred_tm, fuse_k1 = device_flags()
    tm = select_tile_m(batch, preferred_tm)

    key = jax.random.PRNGKey(0)
    kp, ks, ke = jax.random.split(key, 3)

    params = make_params(kp, num_students, num_exercises, d_model)
    stu_ids = jax.random.randint(ks, (batch,), 0, num_students, jnp.int32)
    exer_ids = jax.random.randint(ke, (batch,), 0, num_exercises, jnp.int32)

    fwd = jax.jit(functools.partial(forward, tm=tm, fuse_k1=fuse_k1))
    output, exer_emb, u_pos, u_neg = fwd(params, stu_ids, exer_ids)
    jax.block_until_ready((output, exer_emb, u_pos, u_neg))

    assert output.shape == (batch,)
    assert exer_emb.shape == (batch, d_model) and exer_emb.dtype == jnp.float32
    assert u_pos.shape == (batch, d_model) and u_pos.dtype == jnp.float32
    assert u_neg.shape == (batch, d_model) and u_neg.dtype == jnp.float32
    # Approx-reciprocal sigmoid can sit a hair outside [0,1]; allow 1e-3 slack.
    assert bool(jnp.all((output >= -1e-3) & (output <= 1.0 + 1e-3)))

    # Numerical check vs f32 reference (bf16 MXU inputs + approx reciprocal
    # give ~1e-3-level drift; 3e-2 tolerance is intentionally generous).
    ref = reference_forward(params, stu_ids, exer_ids)
    max_err = float(jnp.max(jnp.abs(output - ref)))
    assert max_err < 3e-2, f"max abs err {max_err}"

    print("KERNEL_OK")
</pallas_src>

<mosaic_0001>
module attributes {stable_mosaic.version = 11 : i64} {
  func.func @prednet_kernel(%arg0: i32, %arg1: memref<8x128xbf16, #tpu.memory_space<vmem>>, %arg2: memref<8x128xbf16, #tpu.memory_space<vmem>>, %arg3: memref<8x128xbf16, #tpu.memory_space<vmem>>, %arg4: memref<384x256xbf16, #tpu.memory_space<vmem>>, %arg5: memref<1x256xf32, #tpu.memory_space<vmem>>, %arg6: memref<256x128xbf16, #tpu.memory_space<vmem>>, %arg7: memref<1x128xf32, #tpu.memory_space<vmem>>, %arg8: memref<1x128xf32, #tpu.memory_space<vmem>>, %arg9: memref<1x1xf32, #tpu.memory_space<vmem>>, %arg10: memref<8x1xf32, #tpu.memory_space<vmem>>, %arg11: memref<8x384xbf16, #tpu.memory_space<vmem>>) attributes {dimension_semantics = [#tpu.dimension_semantics<parallel>], iteration_bounds = array<i64: 1>, scalar_prefetch = 0 : i64, scratch_operands = 1 : i64, tpu.core_type = #tpu.core_type<tc>, window_params = [{transform_indices = @transform_0, window_bounds = array<i64: 8, 128>}, {transform_indices = @transform_1, window_bounds = array<i64: 8, 128>}, {transform_indices = @transform_2, window_bounds = array<i64: 8, 128>}, {pipeline_mode = #tpu.pipeline_mode<synchronous>, transform_indices = @transform_3, window_bounds = array<i64: 384, 256>}, {pipeline_mode = #tpu.pipeline_mode<synchronous>, transform_indices = @transform_4, window_bounds = array<i64: 1, 256>}, {pipeline_mode = #tpu.pipeline_mode<synchronous>, transform_indices = @transform_5, window_bounds = array<i64: 256, 128>}, {pipeline_mode = #tpu.pipeline_mode<synchronous>, transform_indices = @transform_6, window_bounds = array<i64: 1, 128>}, {pipeline_mode = #tpu.pipeline_mode<synchronous>, transform_indices = @transform_7, window_bounds = array<i64: 1, 128>}, {pipeline_mode = #tpu.pipeline_mode<synchronous>, transform_indices = @transform_8, window_bounds = array<i64: 1, 1>}, {transform_indices = @transform_9, window_bounds = array<i64: 8, 1>}]} {
    %c0 = arith.constant 0 : index
    %c0_0 = arith.constant 0 : index
    %0 = vector.load %arg1[%c0, %c0_0] : memref<8x128xbf16, #tpu.memory_space<vmem>>, vector<8x128xbf16>
    %c0_1 = arith.constant 0 : index
    %c0_2 = arith.constant 0 : index
    %1 = vector.load %arg2[%c0_1, %c0_2] : memref<8x128xbf16, #tpu.memory_space<vmem>>, vector<8x128xbf16>
    %c0_3 = arith.constant 0 : index
    %c0_4 = arith.constant 0 : index
    %2 = vector.load %arg3[%c0_3, %c0_4] : memref<8x128xbf16, #tpu.memory_space<vmem>>, vector<8x128xbf16>
    %c0_5 = arith.constant 0 : index
    %c0_6 = arith.constant 0 : index
    %3 = vector.load %arg11[%c0_5, %c0_6] : memref<8x384xbf16, #tpu.memory_space<vmem>>, vector<8x128xbf16>
    tpu.vector_store %arg11[%c0_5, %c0_6], %0 {strides = array<i32>} : memref<8x384xbf16, #tpu.memory_space<vmem>>, vector<8x128xbf16>,
    %c0_7 = arith.constant 0 : index
    %c128 = arith.constant 128 : index
    %4 = vector.load %arg11[%c0_7, %c128] : memref<8x384xbf16, #tpu.memory_space<vmem>>, vector<8x128xbf16>
    tpu.vector_store %arg11[%c0_7, %c128], %1 {strides = array<i32>} : memref<8x384xbf16, #tpu.memory_space<vmem>>, vector<8x128xbf16>,
    %c0_8 = arith.constant 0 : index
    %c256 = arith.constant 256 : index
    %5 = vector.load %arg11[%c0_8, %c256] : memref<8x384xbf16, #tpu.memory_space<vmem>>, vector<8x128xbf16>
    tpu.vector_store %arg11[%c0_8, %c256], %2 {strides = array<i32>} : memref<8x384xbf16, #tpu.memory_space<vmem>>, vector<8x128xbf16>,
    %c0_9 = arith.constant 0 : index
    %c0_10 = arith.constant 0 : index
    %6 = vector.load %arg11[%c0_9, %c0_10] : memref<8x384xbf16, #tpu.memory_space<vmem>>, vector<8x384xbf16>
    %c0_11 = arith.constant 0 : index
    %c0_12 = arith.constant 0 : index
    %7 = vector.load %arg4[%c0_11, %c0_12] : memref<384x256xbf16, #tpu.memory_space<vmem>>, vector<384x256xbf16>
    %cst = arith.constant dense<0.000000e+00> : vector<8x256xf32>
    %8 = tpu.matmul %6, %7, %cst {dimension_numbers = #tpu.dot_dimension_numbers<[1], [0], [0], [1], [0, 0, 1, 1], [], []>} : vector<8x384xbf16>, vector<384x256xbf16>, vector<8x256xf32> -> vector<8x256xf32>
    %c0_13 = arith.constant 0 : index
    %c0_14 = arith.constant 0 : index
    %9 = vector.load %arg5[%c0_13, %c0_14] : memref<1x256xf32, #tpu.memory_space<vmem>>, vector<1x256xf32>
    %10 = vector.broadcast %9 : vector<1x256xf32> to vector<8x256xf32>
    %11 = arith.addf %8, %10 : vector<8x256xf32>
    %cst_15 = arith.constant 0.000000e+00 : f32
    %12 = vector.broadcast %cst_15 : f32 to vector<8x256xf32>
    %13 = arith.subf %12, %11 : vector<8x256xf32>
    %14 = math.exp %13 : vector<8x256xf32>
    %cst_16 = arith.constant 1.000000e+00 : f32
    %15 = vector.broadcast %cst_16 : f32 to vector<8x256xf32>
    %16 = arith.addf %15, %14 : vector<8x256xf32>
    %17 = tpu.reciprocal %16 {approx = true} : vector<8x256xf32> -> vector<8x256xf32>
    %18 = arith.truncf %17 : vector<8x256xf32> to vector<8x256xbf16>
    %c0_17 = arith.constant 0 : index
    %c0_18 = arith.constant 0 : index
    %19 = vector.load %arg6[%c0_17, %c0_18] : memref<256x128xbf16, #tpu.memory_space<vmem>>, vector<256x128xbf16>
    %cst_19 = arith.constant dense<0.000000e+00> : vector<8x128xf32>
    %20 = tpu.matmul %18, %19, %cst_19 {dimension_numbers = #tpu.dot_dimension_numbers<[1], [0], [0], [1], [0, 0, 1, 1], [], []>} : vector<8x256xbf16>, vector<256x128xbf16>, vector<8x128xf32> -> vector<8x128xf32>
    %c0_20 = arith.constant 0 : index
    %c0_21 = arith.constant 0 : index
    %21 = vector.load %arg7[%c0_20, %c0_21] : memref<1x128xf32, #tpu.memory_space<vmem>>, vector<1x128xf32>
    %22 = vector.broadcast %21 : vector<1x128xf32> to vector<8x128xf32>
    %23 = arith.addf %20, %22 : vector<8x128xf32>
    %cst_22 = arith.constant 0.000000e+00 : f32
    %24 = vector.broadcast %cst_22 : f32 to vector<8x128xf32>
    %25 = arith.subf %24, %23 : vector<8x128xf32>
    %26 = math.exp %25 : vector<8x128xf32>
    %cst_23 = arith.constant 1.000000e+00 : f32
    %27 = vector.broadcast %cst_23 : f32 to vector<8x128xf32>
    %28 = arith.addf %27, %26 : vector<8x128xf32>
    %29 = tpu.reciprocal %28 {approx = true} : vector<8x128xf32> -> vector<8x128xf32>
    %c0_24 = arith.constant 0 : index
    %c0_25 = arith.constant 0 : index
    %30 = vector.load %arg8[%c0_24, %c0_25] : memref<1x128xf32, #tpu.memory_space<vmem>>, vector<1x128xf32>
    %31 = vector.broadcast %30 : vector<1x128xf32> to vector<8x128xf32>
    %32 = arith.mulf %29, %31 : vector<8x128xf32>
    %cst_26 = arith.constant dense<0.000000e+00> : vector<8xf32>
    %33 = vector.multi_reduction <add>, %32, %cst_26 [1] : vector<8x128xf32> to vector<8xf32>
    %34 = vector.shape_cast %33 : vector<8xf32> to vector<8x1xf32>
    %c0_27 = arith.constant 0 : index
    %c0_28 = arith.constant 0 : index
    %35 = vector.load %arg9[%c0_27, %c0_28] : memref<1x1xf32, #tpu.memory_space<vmem>>, vector<1x1xf32>
    %36 = vector.broadcast %35 : vector<1x1xf32> to vector<8x1xf32>
    %37 = arith.addf %34, %36 : vector<8x1xf32>
    %cst_29 = arith.constant 0.000000e+00 : f32
    %38 = vector.broadcast %cst_29 : f32 to vector<8x1xf32>
    %39 = arith.subf %38, %37 : vector<8x1xf32>
    %40 = math.exp %39 : vector<8x1xf32>
    %cst_30 = arith.constant 1.000000e+00 : f32
    %41 = vector.broadcast %cst_30 : f32 to vector<8x1xf32>
    %42 = arith.addf %41, %40 : vector<8x1xf32>
    %43 = tpu.reciprocal %42 {approx = true} : vector<8x1xf32> -> vector<8x1xf32>
    %c0_31 = arith.constant 0 : index
    %c0_32 = arith.constant 0 : index
    %44 = vector.load %arg10[%c0_31, %c0_32] : memref<8x1xf32, #tpu.memory_space<vmem>>, vector<8x1xf32>
    tpu.vector_store %arg10[%c0_31, %c0_32], %43 {strides = array<i32>} : memref<8x1xf32, #tpu.memory_space<vmem>>, vector<8x1xf32>,
    return
  }
  func.func @transform_0(%arg0: i32) -> (i32, i32) {
    %c0_i32 = arith.constant 0 : i32
    %c0_i32_0 = arith.constant 0 : i32
    return %arg0, %c0_i32 : i32, i32
  }
  func.func @transform_1(%arg0: i32) -> (i32, i32) {
    %c0_i32 = arith.constant 0 : i32
    %c0_i32_0 = arith.constant 0 : i32
    return %arg0, %c0_i32 : i32, i32
  }
  func.func @transform_2(%arg0: i32) -> (i32, i32) {
    %c0_i32 = arith.constant 0 : i32
    %c0_i32_0 = arith.constant 0 : i32
    return %arg0, %c0_i32 : i32, i32
  }
  func.func @transform_3(%arg0: i32) -> (i32, i32) {
    %c0_i32 = arith.constant 0 : i32
    %c0_i32_0 = arith.constant 0 : i32
    %c0_i32_1 = arith.constant 0 : i32
    return %c0_i32, %c0_i32_0 : i32, i32
  }
  func.func @transform_4(%arg0: i32) -> (i32, i32) {
    %c0_i32 = arith.constant 0 : i32
    %c0_i32_0 = arith.constant 0 : i32
    %c0_i32_1 = arith.constant 0 : i32
    return %c0_i32, %c0_i32_0 : i32, i32
  }
  func.func @transform_5(%arg0: i32) -> (i32, i32) {
    %c0_i32 = arith.constant 0 : i32
    %c0_i32_0 = arith.constant 0 : i32
    %c0_i32_1 = arith.constant 0 : i32
    return %c0_i32, %c0_i32_0 : i32, i32
  }
  func.func @transform_6(%arg0: i32) -> (i32, i32) {
    %c0_i32 = arith.constant 0 : i32
    %c0_i32_0 = arith.constant 0 : i32
    %c0_i32_1 = arith.constant 0 : i32
    return %c0_i32, %c0_i32_0 : i32, i32
  }
  func.func @transform_7(%arg0: i32) -> (i32, i32) {
    %c0_i32 = arith.constant 0 : i32
    %c0_i32_0 = arith.constant 0 : i32
    %c0_i32_1 = arith.constant 0 : i32
    return %c0_i32, %c0_i32_0 : i32, i32
  }
  func.func @transform_8(%arg0: i32) -> (i32, i32) {
    %c0_i32 = arith.constant 0 : i32
    %c0_i32_0 = arith.constant 0 : i32
    %c0_i32_1 = arith.constant 0 : i32
    return %c0_i32, %c0_i32_0 : i32, i32
  }
  func.func @transform_9(%arg0: i32) -> (i32, i32) {
    %c0_i32 = arith.constant 0 : i32
    %c0_i32_0 = arith.constant 0 : i32
    return %arg0, %c0_i32 : i32, i32
  }
}

</mosaic_0001>

<llo_original>
// kernel: forward.1
$region0: #{forward.1}
  #allocation0 [shape = 'u32[]', space=smem, size = 0x4, offset = 0x4, fixed_abs, tag = 'smem constant byte address 0x4 - core index']
  #allocation1 [shape = 'u32[144,128]{1,0:T(1,128)}', space=vmem, size = 0x12000, scoped, tag = 'internal scratch']
  #allocation2 [shape = 'bf16[8,384]{1,0:T(8,128)(2,1)}', space=vmem, size = 0x1800, scoped, tag = 'scratch operand']
  #allocation3 [shape = 'f32[1,1]{1,0:T(1,128)S(1)}', space=vmem, size = 0x200, scoped, tag = 'scoped memory for forward.1']
  %s0 = inlined_call_operand.vmem [shape: bf16[8,128], index: 0, kind: input, shape index: {}]
  %s1 = inlined_call_operand.vmem [shape: bf16[8,128], index: 1, kind: input, shape index: {}]
  %s2 = inlined_call_operand.vmem [shape: bf16[8,128], index: 2, kind: input, shape index: {}]
  %s3 = inlined_call_operand.hbm [shape: bf16[384,256], index: 3, kind: input, shape index: {}]
  %s4 = inlined_call_operand.vmem [shape: f32[1,256], index: 4, kind: input, shape index: {}]
  %s5 = inlined_call_operand.vmem [shape: bf16[256,128], index: 5, kind: input, shape index: {}]
  %s6 = inlined_call_operand.vmem [shape: f32[1,128], index: 6, kind: input, shape index: {}]
  %s7 = inlined_call_operand.vmem [shape: f32[1,128], index: 7, kind: input, shape index: {}]
  %s8 = inlined_call_operand.<no memory space> [shape: f32[1,1], index: 8, kind: input, shape index: {}]
  %s9 = inlined_call_operand.vmem [shape: f32[8,1], index: 9, kind: output, shape index: {}]
  %s10 = sld [smem:[#allocation0]]
  $region50: #{forward.1} parent=0
    _
  %s12 = ssub.s32 1, %s10
  %s13 = scalar_select 0, %s12, %s10
  %v14 = vstv %s8
  %15 = vst [vmem:[#allocation3] sm:$0x1] %v14
  $region1: #{forward.1} parent=0
    #allocation4 [shape = 'u8[196608]{0}', space=vmem, size = 0x30000, scoped, tag = 'input window, operand 3, single buffered']
    #allocation5 [shape = 's32[1]{0}', space=sflag, size = 0x4, scoped, tag = 'scoped memory for forward.1']
    %16 = vsyncpa [#allocation5], 0
    // Predicated region
    $region2: #{forward.1} parent=1 // pred_check
      _
    $region3: #{forward.1} parent=1 // pred_check_branch
      %18 = sbr.rel (0) target = $region5
    $region4: #{forward.1} parent=1 // pred_region
      _
    $region5: #{forward.1} parent=1 // pred_fallthru
      _
    // Predicated region
    $region6: #{forward.1} parent=1 // pred_check
      _
    $region7: #{forward.1} parent=1 // pred_check_branch
      %20 = sbr.rel (0) target = $region9
    $region8: #{forward.1} parent=1 // pred_region
      _
    $region9: #{forward.1} parent=1 // pred_fallthru
      _
    // Predicated region
    $region10: #{forward.1} parent=1 // pred_check
      _
    $region11: #{forward.1} parent=1 // pred_check_branch
      %22 = sbr.rel (0) target = $region13
    $region12: #{forward.1} parent=1 // pred_region
      _
    $region13: #{forward.1} parent=1 // pred_fallthru
      _
    // Predicated region
    $region14: #{forward.1} parent=1 // pred_check
      _
    $region15: #{forward.1} parent=1 // pred_check_branch
      %24 = sbr.rel (0) target = $region17
    $region16: #{forward.1} parent=1 // pred_region
      %s26 = ssub.s32 6144, 6144
      %27 = vsyncadd [#allocation5], %s26
      %s28 = sshll.u32 [#allocation4], 4
      %s29 = int_to_ptr.vmem [resolvable:$true] %s28
      %34 = dma.hbm_to_vmem [thread:$0]  %s3, 6144, %s29, [#allocation5], 128, 128, 8
    $region17: #{forward.1} parent=1 // pred_fallthru
      _
    // Predicated region
    $region18: #{forward.1} parent=1 // pred_check
      _
    $region19: #{forward.1} parent=1 // pred_check_branch
      %36 = sbr.rel (0) target = $region21
    $region20: #{forward.1} parent=1 // pred_region
      _
    $region21: #{forward.1} parent=1 // pred_fallthru
      _
    // Predicated region
    $region22: #{forward.1} parent=1 // pred_check
      _
    $region23: #{forward.1} parent=1 // pred_check_branch
      %38 = sbr.rel (0) target = $region25
    $region24: #{forward.1} parent=1 // pred_region
      _
    $region25: #{forward.1} parent=1 // pred_fallthru
      _
    // Predicated region
    $region26: #{forward.1} parent=1 // pred_check
      _
    $region27: #{forward.1} parent=1 // pred_check_branch
      %40 = sbr.rel (0) target = $region29
    $region28: #{forward.1} parent=1 // pred_region
      _
    $region29: #{forward.1} parent=1 // pred_fallthru
      _
    // Predicated region
    $region30: #{forward.1} parent=1 // pred_check
      _
    $region31: #{forward.1} parent=1 // pred_check_branch
      %42 = sbr.rel (0) target = $region33
    $region32: #{forward.1} parent=1 // pred_region
      _
    $region33: #{forward.1} parent=1 // pred_fallthru
      _
    // Predicated region
    $region34: #{forward.1} parent=1 // pred_check
      _
    $region35: #{forward.1} parent=1 // pred_check_branch
      %44 = sbr.rel (0) target = $region37
    $region36: #{forward.1} parent=1 // pred_region
      _
    $region37: #{forward.1} parent=1 // pred_fallthru
      _
    // Predicated region
    $region38: #{forward.1} parent=1 // pred_check
      _
    $region39: #{forward.1} parent=1 // pred_check_branch
      %46 = sbr.rel (0) target = $region41
    $region40: #{forward.1} parent=1 // pred_region
      %47 = dma.done [#allocation5], 6144
    $region41: #{forward.1} parent=1 // pred_fallthru
      _
    %v49 = vld [vmem:[%s0] sm:$0xf]
    %v50 = vld [vmem:[%s1] sm:$0xf]
    %v51 = vld [vmem:[%s2] sm:$0xf]
    %52 = vst [vmem:[#allocation2] sm:$0xf] %v49
    %53 = vst [vmem:[#allocation2 + $0x4] sm:$0xf] %v50
    %54 = vst [vmem:[#allocation2 + $0x8] sm:$0xf] %v51
    %v55 = vld [vmem:[#allocation2] sm:$0xff]
    %v56 = vld [vmem:[#allocation2 + $0x8] sm:$0xf]
    %v57 = vld [vmem:[#allocation4] sm:$0xff]
    %v58 = vld [vmem:[#allocation4 + $0x8] sm:$0xff]
    %v59 = vld [vmem:[#allocation4 + $0x10] sm:$0xff]
    %v60 = vld [vmem:[#allocation4 + $0x18] sm:$0xff]
    %v61 = vld [vmem:[#allocation4 + $0x20] sm:$0xff]
    %v62 = vld [vmem:[#allocation4 + $0x28] sm:$0xff]
    %v63 = vld [vmem:[#allocation4 + $0x30] sm:$0xff]
    %v64 = vld [vmem:[#allocation4 + $0x38] sm:$0xff]
    %v65 = vld [vmem:[#allocation4 + $0x40] sm:$0xff]
    %v66 = vld [vmem:[#allocation4 + $0x48] sm:$0xff]
    %v67 = vld [vmem:[#allocation4 + $0x50] sm:$0xff]
    %v68 = vld [vmem:[#allocation4 + $0x58] sm:$0xff]
    %v69 = vld [vmem:[#allocation4 + $0x60] sm:$0xff]
    %v70 = vld [vmem:[#allocation4 + $0x68] sm:$0xff]
    %v71 = vld [vmem:[#allocation4 + $0x70] sm:$0xff]
    %v72 = vld [vmem:[#allocation4 + $0x78] sm:$0xff]
    %v73 = vld [vmem:[#allocation4 + $0x80] sm:$0xff]
    %v74 = vld [vmem:[#allocation4 + $0x88] sm:$0xff]
    %v75 = vld [vmem:[#allocation4 + $0x90] sm:$0xff]
    %v76 = vld [vmem:[#allocation4 + $0x98] sm:$0xff]
    %v77 = vld [vmem:[#allocation4 + $0xa0] sm:$0xff]
    %v78 = vld [vmem:[#allocation4 + $0xa8] sm:$0xff]
    %v79 = vld [vmem:[#allocation4 + $0xb0] sm:$0xff]
    %v80 = vld [vmem:[#allocation4 + $0xb8] sm:$0xff]
    %v81 = vld [vmem:[#allocation4 + $0xc0] sm:$0xff]
    %v82 = vld [vmem:[#allocation4 + $0xc8] sm:$0xff]
    %v83 = vld [vmem:[#allocation4 + $0xd0] sm:$0xff]
    %v84 = vld [vmem:[#allocation4 + $0xd8] sm:$0xff]
    %v85 = vld [vmem:[#allocation4 + $0xe0] sm:$0xff]
    %v86 = vld [vmem:[#allocation4 + $0xe8] sm:$0xff]
    %v87 = vld [vmem:[#allocation4 + $0xf0] sm:$0xff]
    %v88 = vld [vmem:[#allocation4 + $0xf8] sm:$0xff]
    %v89 = vld [vmem:[#allocation4 + $0x100] sm:$0xff]
    %v90 = vld [vmem:[#allocation4 + $0x108] sm:$0xff]
    %v91 = vld [vmem:[#allocation4 + $0x110] sm:$0xff]
    %v92 = vld [vmem:[#allocation4 + $0x118] sm:$0xff]
    %v93 = vld [vmem:[#allocation4 + $0x120] sm:$0xff]
    %v94 = vld [vmem:[#allocation4 + $0x128] sm:$0xff]
    %v95 = vld [vmem:[#allocation4 + $0x130] sm:$0xff]
    %v96 = vld [vmem:[#allocation4 + $0x138] sm:$0xff]
    %v97 = vld [vmem:[#allocation4 + $0x140] sm:$0xff]
    %v98 = vld [vmem:[#allocation4 + $0x148] sm:$0xff]
    %v99 = vld [vmem:[#allocation4 + $0x150] sm:$0xff]
    %v100 = vld [vmem:[#allocation4 + $0x158] sm:$0xff]
    %v101 = vld [vmem:[#allocation4 + $0x160] sm:$0xff]
    %v102 = vld [vmem:[#allocation4 + $0x168] sm:$0xff]
    %v103 = vld [vmem:[#allocation4 + $0x170] sm:$0xff]
    %v104 = vld [vmem:[#allocation4 + $0x178] sm:$0xff]
    %v105 = vld [vmem:[%s4] sm:$0x3]
    %v107 = vlaneseq
    %v108 = vshrl.u32 %v107, 7
    %v109 = vsub.s32 0, %v108
    %v110 = vrot.slane %v105, %v109
    %v111 = vlaneseq
    %v112 = vshrl.u32 %v111, 7
    %v113 = vsub.s32 1, %v112
    %v114 = vrot.slane %v105, %v113
    %v119 = vunpack.c.l.b16 %v55
    %v120 = vunpack.c.h.b16 %v55
    %v121 = vunpack.c.l.b16 %v56
    %v122 = vpack.c.b16 %v119, %v119
    %v123 = vpack.c.b16 %v120, %v120
    %v124 = vpack.c.b16 %v121, %v121
    %v176 = vunpack.c.l.b16 %v57
    %v177 = vunpack.c.h.b16 %v57
    %v178 = vunpack.c.l.b16 %v58
    %v179 = vunpack.c.h.b16 %v58
    %v180 = vunpack.c.l.b16 %v59
    %v181 = vunpack.c.h.b16 %v59
    %v182 = vunpack.c.l.b16 %v60
    %v183 = vunpack.c.h.b16 %v60
    %v184 = vunpack.c.l.b16 %v61
    %v185 = vunpack.c.h.b16 %v61
    %v186 = vunpack.c.l.b16 %v62
    %v187 = vunpack.c.h.b16 %v62
    %v188 = vunpack.c.l.b16 %v63
    %v189 = vunpack.c.h.b16 %v63
    %v190 = vunpack.c.l.b16 %v64
    %v191 = vunpack.c.h.b16 %v64
    %v192 = vunpack.c.l.b16 %v65
    %v193 = vunpack.c.h.b16 %v65
    %v194 = vunpack.c.l.b16 %v66
    %v195 = vunpack.c.h.b16 %v66
    %v196 = vunpack.c.l.b16 %v67
    %v197 = vunpack.c.h.b16 %v67
    %v198 = vunpack.c.l.b16 %v68
    %v199 = vunpack.c.h.b16 %v68
    %v200 = vunpack.c.l.b16 %v69
    %v201 = vunpack.c.h.b16 %v69
    %v202 = vunpack.c.l.b16 %v70
    %v203 = vunpack.c.h.b16 %v70
    %v204 = vunpack.c.l.b16 %v71
    %v205 = vunpack.c.h.b16 %v71
    %v206 = vunpack.c.l.b16 %v72
    %v207 = vunpack.c.h.b16 %v72
    %v208 = vunpack.c.l.b16 %v73
    %v209 = vunpack.c.h.b16 %v73
    %v210 = vunpack.c.l.b16 %v74
    %v211 = vunpack.c.h.b16 %v74
    %v212 = vunpack.c.l.b16 %v75
    %v213 = vunpack.c.h.b16 %v75
    %v214 = vunpack.c.l.b16 %v76
    %v215 = vunpack.c.h.b16 %v76
    %v216 = vunpack.c.l.b16 %v77
    %v217 = vunpack.c.h.b16 %v77
    %v218 = vunpack.c.l.b16 %v78
    %v219 = vunpack.c.h.b16 %v78
    %v220 = vunpack.c.l.b16 %v79
    %v221 = vunpack.c.h.b16 %v79
    %v222 = vunpack.c.l.b16 %v80
    %v223 = vunpack.c.h.b16 %v80
    %v224 = vunpack.c.l.b16 %v81
    %v225 = vunpack.c.h.b16 %v81
    %v226 = vunpack.c.l.b16 %v82
    %v227 = vunpack.c.h.b16 %v82
    %v228 = vunpack.c.l.b16 %v83
    %v229 = vunpack.c.h.b16 %v83
    %v230 = vunpack.c.l.b16 %v84
    %v231 = vunpack.c.h.b16 %v84
    %v232 = vunpack.c.l.b16 %v85
    %v233 = vunpack.c.h.b16 %v85
    %v234 = vunpack.c.l.b16 %v86
    %v235 = vunpack.c.h.b16 %v86
    %v236 = vunpack.c.l.b16 %v87
    %v237 = vunpack.c.h.b16 %v87
    %v238 = vunpack.c.l.b16 %v88
    %v239 = vunpack.c.h.b16 %v88
    %v240 = vunpack.c.l.b16 %v89
    %v241 = vunpack.c.h.b16 %v89
    %v242 = vunpack.c.l.b16 %v90
    %v243 = vunpack.c.h.b16 %v90
    %v244 = vunpack.c.l.b16 %v91
    %v245 = vunpack.c.h.b16 %v91
    %v246 = vunpack.c.l.b16 %v92
    %v247 = vunpack.c.h.b16 %v92
    %v248 = vunpack.c.l.b16 %v93
    %v249 = vunpack.c.h.b16 %v93
    %v250 = vunpack.c.l.b16 %v94
    %v251 = vunpack.c.h.b16 %v94
    %v252 = vunpack.c.l.b16 %v95
    %v253 = vunpack.c.h.b16 %v95
    %v254 = vunpack.c.l.b16 %v96
    %v255 = vunpack.c.h.b16 %v96
    %v256 = vunpack.c.l.b16 %v97
    %v257 = vunpack.c.h.b16 %v97
    %v258 = vunpack.c.l.b16 %v98
    %v259 = vunpack.c.h.b16 %v98
    %v260 = vunpack.c.l.b16 %v99
    %v261 = vunpack.c.h.b16 %v99
    %v262 = vunpack.c.l.b16 %v100
    %v263 = vunpack.c.h.b16 %v100
    %v264 = vunpack.c.l.b16 %v101
    %v265 = vunpack.c.h.b16 %v101
    %v266 = vunpack.c.l.b16 %v102
    %v267 = vunpack.c.h.b16 %v102
    %v268 = vunpack.c.l.b16 %v103
    %v269 = vunpack.c.h.b16 %v103
    %v270 = vunpack.c.l.b16 %v104
    %v271 = vunpack.c.h.b16 %v104
    %v272 = vpack.c.b16 %v178, %v176
    %v273 = vpack.c.b16 %v179, %v177
    %v274 = vpack.c.b16 %v182, %v180
    %v275 = vpack.c.b16 %v183, %v181
    %v276 = vpack.c.b16 %v186, %v184
    %v277 = vpack.c.b16 %v187, %v185
    %v278 = vpack.c.b16 %v190, %v188
    %v279 = vpack.c.b16 %v191, %v189
    %v280 = vpack.c.b16 %v194, %v192
    %v281 = vpack.c.b16 %v195, %v193
    %v282 = vpack.c.b16 %v198, %v196
    %v283 = vpack.c.b16 %v199, %v197
    %v284 = vpack.c.b16 %v202, %v200
    %v285 = vpack.c.b16 %v203, %v201
    %v286 = vpack.c.b16 %v206, %v204
    %v287 = vpack.c.b16 %v207, %v205
    %v288 = vpack.c.b16 %v210, %v208
    %v289 = vpack.c.b16 %v211, %v209
    %v290 = vpack.c.b16 %v214, %v212
    %v291 = vpack.c.b16 %v215, %v213
    %v292 = vpack.c.b16 %v218, %v216
    %v293 = vpack.c.b16 %v219, %v217
    %v294 = vpack.c.b16 %v222, %v220
    %v295 = vpack.c.b16 %v223, %v221
    %v296 = vpack.c.b16 %v226, %v224
    %v297 = vpack.c.b16 %v227, %v225
    %v298 = vpack.c.b16 %v230, %v228
    %v299 = vpack.c.b16 %v231, %v229
    %v300 = vpack.c.b16 %v234, %v232
    %v301 = vpack.c.b16 %v235, %v233
    %v302 = vpack.c.b16 %v238, %v236
    %v303 = vpack.c.b16 %v239, %v237
    %v304 = vpack.c.b16 %v242, %v240
    %v305 = vpack.c.b16 %v243, %v241
    %v306 = vpack.c.b16 %v246, %v244
    %v307 = vpack.c.b16 %v247, %v245
    %v308 = vpack.c.b16 %v250, %v248
    %v309 = vpack.c.b16 %v251, %v249
    %v310 = vpack.c.b16 %v254, %v252
    %v311 = vpack.c.b16 %v255, %v253
    %v312 = vpack.c.b16 %v258, %v256
    %v313 = vpack.c.b16 %v259, %v257
    %v314 = vpack.c.b16 %v262, %v260
    %v315 = vpack.c.b16 %v263, %v261
    %v316 = vpack.c.b16 %v266, %v264
    %v317 = vpack.c.b16 %v267, %v265
    %v318 = vpack.c.b16 %v270, %v268
    %v319 = vpack.c.b16 %v271, %v269
    %368 = vmatprep.subr.bf16.mxu0 %v273
    %369 = vmatpush1.bf16.msra.mxu0 %v272
    %370 = vmatprep.subr.bf16.mxu0 %v275
    %371 = vmatpush1.bf16.msra.mxu0 %v274
    %372 = vmatprep.subr.bf16.mxu0 %v277
    %373 = vmatpush1.bf16.msra.mxu0 %v276
    %374 = vmatprep.subr.bf16.mxu0 %v279
    %375 = vmatpush1.bf16.msra.mxu0 %v278
    %376 = vmatprep.subr.bf16.mxu0 %v281
    %377 = vmatpush1.bf16.msra.mxu0 %v280
    %378 = vmatprep.subr.bf16.mxu0 %v283
    %379 = vmatpush1.bf16.msra.mxu0 %v282
    %380 = vmatprep.subr.bf16.mxu0 %v285
    %381 = vmatpush1.bf16.msra.mxu0 %v284
    %382 = vmatprep.subr.bf16.mxu0 %v287
    %383 = vmatpush1.bf16.msra.mxu0 %v286
    %384 = vmatprep.subr.bf16.mxu0 %v289
    %385 = vmatpush1.bf16.msra.mxu0 %v288
    %386 = vmatprep.subr.bf16.mxu0 %v291
    %387 = vmatpush1.bf16.msra.mxu0 %v290
    %388 = vmatprep.subr.bf16.mxu0 %v293
    %389 = vmatpush1.bf16.msra.mxu0 %v292
    %390 = vmatprep.subr.bf16.mxu0 %v295
    %391 = vmatpush1.bf16.msra.mxu0 %v294
    %392 = vmatprep.subr.bf16.mxu0 %v297
    %393 = vmatpush1.bf16.msra.mxu0 %v296
    %394 = vmatprep.subr.bf16.mxu0 %v299
    %395 = vmatpush1.bf16.msra.mxu0 %v298
    %396 = vmatprep.subr.bf16.mxu0 %v301
    %397 = vmatpush1.bf16.msra.mxu0 %v300
    %398 = vmatprep.subr.bf16.mxu0 %v303
    %399 = vmatpush1.bf16.msra.mxu0 %v302
    %400 = vmatprep.mubr.bf16.mxu0 %v123
    %401 = vmatmul.mubr.bf16.gmra.mrb[0].mxu0 %v122
    %v402 = vpop.f32.mrb[0].mxu0
    %v403 = vadd.f32 %v110, %v402
    %v404 = vpop.f32.mrb[0].mxu0
    %v405 = vadd.f32 %v114, %v404
    %v406 = vpop.f32.mrb[0].mxu0
    %v407 = vpop.f32.mrb[0].mxu0
    %408 = vdwg.mxu0
    %409 = vmatprep.subr.bf16.mxu0 %v305
    %410 = vmatpush1.bf16.msra.mxu0 %v304
    %411 = vmatprep.subr.bf16.mxu0 %v307
    %412 = vmatpush1.bf16.msra.mxu0 %v306
    %413 = vmatprep.subr.bf16.mxu0 %v309
    %414 = vmatpush1.bf16.msra.mxu0 %v308
    %415 = vmatprep.subr.bf16.mxu0 %v311
    %416 = vmatpush1.bf16.msra.mxu0 %v310
    %417 = vmatprep.subr.bf16.mxu0 %v313
    %418 = vmatpush1.bf16.msra.mxu0 %v312
    %419 = vmatprep.subr.bf16.mxu0 %v315
    %420 = vmatpush1.bf16.msra.mxu0 %v314
    %421 = vmatprep.subr.bf16.mxu0 %v317
    %422 = vmatpush1.bf16.msra.mxu0 %v316
    %423 = vmatprep.subr.bf16.mxu0 %v319
    %424 = vmatpush1.bf16.msra.mxu0 %v318
    %425 = vmatprep.subr.bf16.mxu0 0
    %426 = vmatpush1.bf16.msra.mxu0 0
    %427 = vmatprep.subr.bf16.mxu0 0
    %428 = vmatpush1.bf16.msra.mxu0 0
    %429 = vmatprep.subr.bf16.mxu0 0
    %430 = vmatpush1.bf16.msra.mxu0 0
    %431 = vmatprep.subr.bf16.mxu0 0
    %432 = vmatpush1.bf16.msra.mxu0 0
    %433 = vmatprep.subr.bf16.mxu0 0
    %434 = vmatpush1.bf16.msra.mxu0 0
    %435 = vmatprep.subr.bf16.mxu0 0
    %436 = vmatpush1.bf16.msra.mxu0 0
    %437 = vmatprep.subr.bf16.mxu0 0
    %438 = vmatpush1.bf16.msra.mxu0 0
    %439 = vmatprep.subr.bf16.mxu0 0
    %440 = vmatpush1.bf16.msra.mxu0 0
    %441 = vmatprep.mubr.bf16.mxu0 0
    %442 = vmatmul.mubr.bf16.gmra.mrb[0].mxu0 %v124
    %v443 = vpop.f32.mrb[0].mxu0
    %v444 = vadd.f32 %v403, %v443
    %v445 = vpop.f32.mrb[0].mxu0
    %v446 = vadd.f32 %v405, %v445
    %v447 = vpop.f32.mrb[0].mxu0
    %v448 = vpop.f32.mrb[0].mxu0
    %449 = vdwg.mxu0
    %v450 = vsub.f32 0.0, %v444
    %v451 = vsub.f32 0.0, %v446
    %v452 = vmul.f32 %v450, 1.442695
    %v453 = vpow.pop %v452
    %v454 = vmul.f32 %v451, 1.442695
    %v455 = vpow.pop %v454
    %v456 = vadd.f32 %v453, 1.0
    %v457 = vadd.f32 %v455, 1.0
    %v458 = vrcp.pop %v456
    %v459 = vrcp.pop %v457
    %v460 = vpack.c.bf16 %v458, %v458
    %v461 = vpack.c.bf16 %v459, %v459
    %v462 = vld [vmem:[%s5] sm:$0xf]
    %v463 = vld [vmem:[%s5 + $0x4] sm:$0xf]
    %v464 = vld [vmem:[%s5 + $0x8] sm:$0xf]
    %v465 = vld [vmem:[%s5 + $0xc] sm:$0xf]
    %v466 = vld [vmem:[%s5 + $0x10] sm:$0xf]
    %v467 = vld [vmem:[%s5 + $0x14] sm:$0xf]
    %v468 = vld [vmem:[%s5 + $0x18] sm:$0xf]
    %v469 = vld [vmem:[%s5 + $0x1c] sm:$0xf]
    %v470 = vld [vmem:[%s5 + $0x20] sm:$0xf]
    %v471 = vld [vmem:[%s5 + $0x24] sm:$0xf]
    %v472 = vld [vmem:[%s5 + $0x28] sm:$0xf]
    %v473 = vld [vmem:[%s5 + $0x2c] sm:$0xf]
    %v474 = vld [vmem:[%s5 + $0x30] sm:$0xf]
    %v475 = vld [vmem:[%s5 + $0x34] sm:$0xf]
    %v476 = vld [vmem:[%s5 + $0x38] sm:$0xf]
    %v477 = vld [vmem:[%s5 + $0x3c] sm:$0xf]
    %v478 = vld [vmem:[%s5 + $0x40] sm:$0xf]
    %v479 = vld [vmem:[%s5 + $0x44] sm:$0xf]
    %v480 = vld [vmem:[%s5 + $0x48] sm:$0xf]
    %v481 = vld [vmem:[%s5 + $0x4c] sm:$0xf]
    %v482 = vld [vmem:[%s5 + $0x50] sm:$0xf]
    %v483 = vld [vmem:[%s5 + $0x54] sm:$0xf]
    %v484 = vld [vmem:[%s5 + $0x58] sm:$0xf]
    %v485 = vld [vmem:[%s5 + $0x5c] sm:$0xf]
    %v486 = vld [vmem:[%s5 + $0x60] sm:$0xf]
    %v487 = vld [vmem:[%s5 + $0x64] sm:$0xf]
    %v488 = vld [vmem:[%s5 + $0x68] sm:$0xf]
    %v489 = vld [vmem:[%s5 + $0x6c] sm:$0xf]
    %v490 = vld [vmem:[%s5 + $0x70] sm:$0xf]
    %v491 = vld [vmem:[%s5 + $0x74] sm:$0xf]
    %v492 = vld [vmem:[%s5 + $0x78] sm:$0xf]
    %v493 = vld [vmem:[%s5 + $0x7c] sm:$0xf]
    %v494 = vld [vmem:[%s6] sm:$0x1]
    %v496 = vlaneseq
    %v497 = vshrl.u32 %v496, 7
    %v498 = vsub.s32 0, %v497
    %v499 = vrot.slane %v494, %v498
    %v533 = vunpack.c.l.b16 %v462
    %v534 = vunpack.c.l.b16 %v463
    %v535 = vunpack.c.l.b16 %v464
    %v536 = vunpack.c.l.b16 %v465
    %v537 = vunpack.c.l.b16 %v466
    %v538 = vunpack.c.l.b16 %v467
    %v539 = vunpack.c.l.b16 %v468
    %v540 = vunpack.c.l.b16 %v469
    %v541 = vunpack.c.l.b16 %v470
    %v542 = vunpack.c.l.b16 %v471
    %v543 = vunpack.c.l.b16 %v472
    %v544 = vunpack.c.l.b16 %v473
    %v545 = vunpack.c.l.b16 %v474
    %v546 = vunpack.c.l.b16 %v475
    %v547 = vunpack.c.l.b16 %v476
    %v548 = vunpack.c.l.b16 %v477
    %v549 = vunpack.c.l.b16 %v478
    %v550 = vunpack.c.l.b16 %v479
    %v551 = vunpack.c.l.b16 %v480
    %v552 = vunpack.c.l.b16 %v481
    %v553 = vunpack.c.l.b16 %v482
    %v554 = vunpack.c.l.b16 %v483
    %v555 = vunpack.c.l.b16 %v484
    %v556 = vunpack.c.l.b16 %v485
    %v557 = vunpack.c.l.b16 %v486
    %v558 = vunpack.c.l.b16 %v487
    %v559 = vunpack.c.l.b16 %v488
    %v560 = vunpack.c.l.b16 %v489
    %v561 = vunpack.c.l.b16 %v490
    %v562 = vunpack.c.l.b16 %v491
    %v563 = vunpack.c.l.b16 %v492
    %v564 = vunpack.c.l.b16 %v493
    %v565 = vpack.c.b16 %v534, %v533
    %v566 = vpack.c.b16 %v536, %v535
    %v567 = vpack.c.b16 %v538, %v537
    %v568 = vpack.c.b16 %v540, %v539
    %v569 = vpack.c.b16 %v542, %v541
    %v570 = vpack.c.b16 %v544, %v543
    %v571 = vpack.c.b16 %v546, %v545
    %v572 = vpack.c.b16 %v548, %v547
    %v573 = vpack.c.b16 %v550, %v549
    %v574 = vpack.c.b16 %v552, %v551
    %v575 = vpack.c.b16 %v554, %v553
    %v576 = vpack.c.b16 %v556, %v555
    %v577 = vpack.c.b16 %v558, %v557
    %v578 = vpack.c.b16 %v560, %v559
    %v579 = vpack.c.b16 %v562, %v561
    %v580 = vpack.c.b16 %v564, %v563
    %597 = vmatprep.subr.bf16.mxu0 0
    %598 = vmatpush1.bf16.msra.mxu0 %v565
    %599 = vmatprep.subr.bf16.mxu0 0
    %600 = vmatpush1.bf16.msra.mxu0 %v566
    %601 = vmatprep.subr.bf16.mxu0 0
    %602 = vmatpush1.bf16.msra.mxu0 %v567
    %603 = vmatprep.subr.bf16.mxu0 0
    %604 = vmatpush1.bf16.msra.mxu0 %v568
    %605 = vmatprep.subr.bf16.mxu0 0
    %606 = vmatpush1.bf16.msra.mxu0 %v569
    %607 = vmatprep.subr.bf16.mxu0 0
    %608 = vmatpush1.bf16.msra.mxu0 %v570
    %609 = vmatprep.subr.bf16.mxu0 0
    %610 = vmatpush1.bf16.msra.mxu0 %v571
    %611 = vmatprep.subr.bf16.mxu0 0
    %612 = vmatpush1.bf16.msra.mxu0 %v572
    %613 = vmatprep.subr.bf16.mxu0 0
    %614 = vmatpush1.bf16.msra.mxu0 %v573
    %615 = vmatprep.subr.bf16.mxu0 0
    %616 = vmatpush1.bf16.msra.mxu0 %v574
    %617 = vmatprep.subr.bf16.mxu0 0
    %618 = vmatpush1.bf16.msra.mxu0 %v575
    %619 = vmatprep.subr.bf16.mxu0 0
    %620 = vmatpush1.bf16.msra.mxu0 %v576
    %621 = vmatprep.subr.bf16.mxu0 0
    %622 = vmatpush1.bf16.msra.mxu0 %v577
    %623 = vmatprep.subr.bf16.mxu0 0
    %624 = vmatpush1.bf16.msra.mxu0 %v578
    %625 = vmatprep.subr.bf16.mxu0 0
    %626 = vmatpush1.bf16.msra.mxu0 %v579
    %627 = vmatprep.subr.bf16.mxu0 0
    %628 = vmatpush1.bf16.msra.mxu0 %v580
    %629 = vmatprep.mubr.bf16.mxu0 %v461
    %630 = vmatmul.mubr.bf16.gmra.mrb[0].mxu0 %v460
    %v631 = vpop.f32.mrb[0].mxu0
    %v632 = vadd.f32 %v499, %v631
    %v633 = vpop.f32.mrb[0].mxu0
    %v634 = vpop.f32.mrb[0].mxu0
    %v635 = vpop.f32.mrb[0].mxu0
    %636 = vdwg.mxu0
    %v637 = vsub.f32 0.0, %v632
    %v638 = vmul.f32 %v637, 1.442695
    %v639 = vpow.pop %v638
    %v640 = vadd.f32 %v639, 1.0
    %v641 = vrcp.pop %v640
    %v642 = vld [vmem:[%s7] sm:$0x1]
    %v644 = vlaneseq
    %v645 = vshrl.u32 %v644, 7
    %v646 = vsub.s32 0, %v645
    %v647 = vrot.slane %v642, %v646
    %v649 = vmul.f32 %v641, %v647
    %650 = vadd.xlane.f32.xlu0 %v649
    %v651 = vpop.xlane.xlu0 %650
    %v652 = vld [vmem:[#allocation3] sm:$0x1]
    %v654 = vlaneseq
    %v655 = vshrl.u32 %v654, 7
    %v656 = vsub.s32 0, %v655
    %v657 = vrot.slane %v652, %v656
    %v659 = vadd.f32 %v651, %v657
    %v660 = vsub.f32 0.0, %v659
    %v661 = vmul.f32 %v660, 1.442695
    %v662 = vpow.pop %v661
    %v663 = vadd.f32 %v662, 1.0
    %v664 = vrcp.pop %v663
    %vm665 = vcmask 7168
    %666 = vst.msk [vmem:[%s9] sm:$0xff] %vm665, %v664
    // Predicated region
    $region42: #{forward.1} parent=1 // pred_check
      _
    $region43: #{forward.1} parent=1 // pred_check_branch
      %668 = sbr.rel (0) target = $region45
    $region44: #{forward.1} parent=1 // pred_region
      _
    $region45: #{forward.1} parent=1 // pred_fallthru
      _
    // Predicated region
    $region46: #{forward.1} parent=1 // pred_check
      _
    $region47: #{forward.1} parent=1 // pred_check_branch
      %670 = sbr.rel (0) target = $region49
    $region48: #{forward.1} parent=1 // pred_region
      _
    $region49: #{forward.1} parent=1 // pred_fallthru
      _
    %671 = vsyncpa [#allocation5], 1

</llo_original>
